<compile_context>
chip_gen: v6e
topology: v6e:2x2x1
jax: 0.10.0
libtpu: 0.0.40
codegen_flags: <defaults>
</compile_context>

<pallas_src>
import jax
import jax.numpy as jnp
from jax.experimental import pallas as pl
from jax.experimental.pallas import tpu as pltpu

_LANE = 128      # lane width (last-dim tile)
_SUBLANE = 8     # f32 sublane count (second-to-last-dim tile)


def _round_up(x, m):
    return (x + m - 1) // m * m


def _layer_dims(topology):
    """np.array(topology).repeat(2)[1:-1].reshape(-1, 2) -> [(din, dout), ...]."""
    assert len(topology) % 2 == 1, "topology must have odd length"
    rep = []
    for t in topology:
        rep += [t, t]
    rep = rep[1:-1]
    return [(rep[2 * i], rep[2 * i + 1]) for i in range(len(rep) // 2)]


def make_autoencoder_params(topology, key):
    """nn.Linear-style init. Returns list of (w_t, b): w_t is (din, dout)
    (already transposed for `x @ w_t`), b is (dout,)."""
    params = []
    for din, dout in _layer_dims(topology):
        kw, kb, key = jax.random.split(key, 3)
        bound = 1.0 / jnp.sqrt(jnp.float32(din))  # PyTorch-style uniform bound
        w = jax.random.uniform(kw, (dout, din), jnp.float32, -bound, bound)
        b = jax.random.uniform(kb, (dout,), jnp.float32, -bound, bound)
        params.append((w.T, b))
    return params


def pack_params(params, topology, weight_dtype=jnp.float32):
    """Zero-pad every layer to a common (P, P) / (1, P) shape (P = 128-multiple
    of the widest layer) and stack, so one gridded kernel handles all layers.
    Zero padding is exact: padded rows/cols contribute 0 to the matmul and the
    padded activation lanes stay 0 through bias-add and ReLU.
    Weights may be stored as bf16 (halves weight-DMA bytes); bias stays f32
    since it is added after the f32-accumulated dot."""
    # TODO(synk): per-layer padding (round_up(din) x round_up(dout)) would cut
    # weight bytes further for very asymmetric topologies, but requires the
    # statically-unrolled (non-grid) kernel variant with per-layer arrays.
    dims = _layer_dims(topology)
    L = len(dims)
    P = _round_up(max(topology), _LANE)
    w_stack = jnp.zeros((L, P, P), weight_dtype)
    b_stack = jnp.zeros((L, 1, P), jnp.float32)
    for l, ((w_t, b), (din, dout)) in enumerate(zip(params, dims)):
        w_stack = w_stack.at[l, :din, :dout].set(w_t.astype(weight_dtype))
        b_stack = b_stack.at[l, 0, :dout].set(b)
    return w_stack, b_stack


def _kernel_factory(num_layers, compute_dtype):
    """Grid (batch_tile b, layer l). The running activation lives in a VMEM
    scratch across the layer axis; only the per-layer pre-activation z is
    stored (lane-dense (1, bt, P) block, written once per grid step)."""
    def kernel(x_ref, w_ref, b_ref, z_ref, act_ref):
        # x_ref: (bt, P)  w_ref: (1, P, P)  b_ref: (1, 1, P)
        # z_ref: (1, bt, P)  act_ref (scratch): (bt, P) f32
        l = pl.program_id(1)

        @pl.when(l == 0)
        def _init():                       # new batch tile: load input
            act_ref[...] = x_ref[...]

        z = jnp.dot(act_ref[...].astype(compute_dtype), w_ref[0],
                    preferred_element_type=jnp.float32)
        z = z + b_ref[0]
        z_ref[0] = z                       # lane-dense store (last dim = P)

        @pl.when(l + 1 < num_layers)
        def _carry():                      # ReLU stays on-chip
            act_ref[...] = jnp.maximum(z, 0.0)

    return kernel


def make_autoencoder_forward(topology, compute_dtype=jnp.float32,
                             batch_tile=256):
    """Returns jitted forward(x, w_stack, b_stack) -> (reconstruction, dict).
    `w_stack` must be packed with pack_params(..., weight_dtype=compute_dtype).
    """
    dims = tuple(_layer_dims(topology))
    L = len(dims)
    P = _round_up(max(topology), _LANE)
    wbytes = jnp.dtype(compute_dtype).itemsize
    kernel = _kernel_factory(L, compute_dtype)

    # Generation-aware VMEM ceiling (v5e/v6e: 128 MiB physical, v7x: 64 MiB).
    try:
        vmem_cap = int(pltpu.get_tpu_info().vmem_capacity_bytes)
    except Exception:  # fall back to the most restrictive generation (v7x)
        vmem_cap = 64 * 1024 * 1024

    def _fused_call(xp, w_stack, b_stack, bt, nb):
        Bp = xp.shape[0]
        # Resident VMEM per grid step: x block + act scratch (single-buffered,
        # block index constant along l) + double-buffered weight/bias/z blocks.
        vmem_needed = (bt * P * 4                 # x block
                       + bt * P * 4               # act scratch
                       + 2 * P * P * wbytes       # weight block (x2 pipeline)
                       + 2 * P * 4                # bias block  (x2 pipeline)
                       + 2 * bt * P * 4)          # z out block (x2 pipeline)
        vmem_limit = min(int(vmem_cap * 0.9),
                         max(2 * vmem_needed + (4 << 20), 32 << 20))
        assert vmem_needed < vmem_limit, (
            "topology too wide for the single weight block per layer")
        # TODO(synk): for layer widths whose (P,P) weight block no longer fits,
        # add an inner (tn, tk) tiled reduction (256-aligned on v6e/v7x,
        # 128-aligned on v5e) with a VMEM f32 accumulator.

        flops = 2 * nb * L * bt * P * P
        bytes_accessed = (nb * L * P * P * wbytes  # weights (re-read per tile)
                          + nb * L * P * 4         # bias
                          + Bp * P * 4             # x
                          + L * Bp * P * 4)        # z slab writeback

        return pl.pallas_call(
            kernel,
            out_shape=jax.ShapeDtypeStruct((L, Bp, P), jnp.float32),
            grid_spec=pltpu.PrefetchScalarGridSpec(
                num_scalar_prefetch=0,
                grid=(nb, L),
                in_specs=[
                    pl.BlockSpec((bt, P), lambda b, l: (b, 0)),
                    pl.BlockSpec((1, P, P), lambda b, l: (l, 0, 0)),
                    pl.BlockSpec((1, 1, P), lambda b, l: (l, 0, 0)),
                ],
                out_specs=pl.BlockSpec((1, bt, P), lambda b, l: (l, b, 0)),
                scratch_shapes=[pltpu.VMEM((bt, P), jnp.float32)],
            ),
            compiler_params=pltpu.CompilerParams(
                dimension_semantics=("parallel", "arbitrary"),
                vmem_limit_bytes=vmem_limit,
            ),
            cost_estimate=pl.CostEstimate(
                flops=flops, bytes_accessed=bytes_accessed, transcendentals=0),
        )(xp, w_stack, b_stack)

    @jax.jit
    def forward(x, w_stack, b_stack):
        B = x.shape[0]
        d0 = dims[0][0]
        # Batch tiling: small batches -> one tile; large batches -> 256-row
        # tiles on a "parallel" grid axis (lets v7x's 2 TCs split the batch).
        Bp0 = _round_up(max(B, _SUBLANE), _SUBLANE)
        bt = Bp0 if Bp0 <= batch_tile else batch_tile
        Bp = _round_up(Bp0, bt)
        nb = Bp // bt
        # Zero-pad the input batch/features into the (Bp, P) slab.
        xp = jnp.zeros((Bp, P), jnp.float32).at[:B, :d0].set(
            x.astype(jnp.float32))

        z_slab = _fused_call(xp, w_stack, b_stack, bt, nb)

        # Unpack IntermediateSequential-style outputs (string module indices).
        intermediate = {}
        idx = 0
        out = x
        for l, (_, dout) in enumerate(dims):
            z = z_slab[l, :B, :dout]
            intermediate[str(idx)] = z            # Linear output
            idx += 1
            if l < L - 1:
                a = jnp.maximum(z, 0.0)           # ReLU output (fused by XLA)
                intermediate[str(idx)] = a
                idx += 1
                out = a
            else:
                out = z
        return out, intermediate

    return forward


def _reference(x, params):
    """Pure-JAX f32 reference producing every submodule output."""
    ref = x
    ref_inter = {}
    idx = 0
    for li, (w_t, b) in enumerate(params):
        z = ref @ w_t + b
        ref_inter[str(idx)] = z
        idx += 1
        if li != len(params) - 1:
            ref = jnp.maximum(z, 0.0)
            ref_inter[str(idx)] = ref
            idx += 1
        else:
            ref = z
    return ref, ref_inter


if __name__ == "__main__":
    # Small, shape-consistent example: topology [32, 16, 8, 16, 32], batch 8.
    topology = [32, 16, 8, 16, 32]
    batch = 8

    key = jax.random.PRNGKey(0)
    kx, kx2, kp = jax.random.split(key, 3)
    x = jax.random.normal(kx, (batch, topology[0]), dtype=jnp.float32)
    params = make_autoencoder_params(topology, kp)
    ref_out, ref_inter = _reference(x, params)

    # ---- f32 path: exact validation against the f32 reference. -------------
    w32, b32 = pack_params(params, topology, weight_dtype=jnp.float32)
    fwd_f32 = make_autoencoder_forward(topology, compute_dtype=jnp.float32)
    rec32, inter32 = fwd_f32(x, w32, b32)
    jax.block_until_ready(rec32)

    assert rec32.shape == (batch, topology[-1])
    assert jnp.allclose(rec32, ref_out, atol=1e-5, rtol=1e-5)
    assert len(inter32) == 2 * len(params) - 1
    for k, v in ref_inter.items():
        assert inter32[k].shape == v.shape
        assert jnp.allclose(inter32[k], v, atol=1e-5, rtol=1e-5)

    # ---- bf16-weight path: halves weight-DMA bytes (HBM-bound regime). -----
    wbf, bbf = pack_params(params, topology, weight_dtype=jnp.bfloat16)
    fwd_bf16 = make_autoencoder_forward(topology, compute_dtype=jnp.bfloat16)
    rec_bf, inter_bf = fwd_bf16(x, wbf, bbf)
    jax.block_until_ready(rec_bf)
    assert rec_bf.shape == (batch, topology[-1])
    assert jnp.allclose(rec_bf, ref_out, atol=5e-2, rtol=5e-2)
    for k, v in ref_inter.items():
        assert inter_bf[k].shape == v.shape
        assert jnp.allclose(inter_bf[k], v, atol=5e-2, rtol=5e-2)

    # ---- larger, non-aligned batch: exercises batch tiling + row padding. --
    batch2 = 300                                   # -> bt=256, nb=2 (padded)
    x2 = jax.random.normal(kx2, (batch2, topology[0]), dtype=jnp.float32)
    ref_out2, ref_inter2 = _reference(x2, params)
    rec2, inter2 = fwd_f32(x2, w32, b32)
    jax.block_until_ready(rec2)
    assert rec2.shape == (batch2, topology[-1])
    assert jnp.allclose(rec2, ref_out2, atol=1e-5, rtol=1e-5)
    for k, v in ref_inter2.items():
        assert jnp.allclose(inter2[k], v, atol=1e-5, rtol=1e-5)

    print("KERNEL_OK")
</pallas_src>

<mosaic_0001>
module attributes {stable_mosaic.version = 11 : i64} {
  func.func @kernel(%arg0: i32, %arg1: i32, %arg2: memref<8x128xf32, #tpu.memory_space<vmem>>, %arg3: memref<1x128x128xf32, #tpu.memory_space<vmem>>, %arg4: memref<1x1x128xf32, #tpu.memory_space<vmem>>, %arg5: memref<1x8x128xf32, #tpu.memory_space<vmem>>, %arg6: memref<8x128xf32, #tpu.memory_space<vmem>>) attributes {dimension_semantics = [#tpu.dimension_semantics<parallel>, #tpu.dimension_semantics<arbitrary>], iteration_bounds = array<i64: 1, 4>, scalar_prefetch = 0 : i64, scratch_operands = 1 : i64, tpu.core_type = #tpu.core_type<tc>, window_params = [{transform_indices = @transform_0, window_bounds = array<i64: 8, 128>}, {transform_indices = @transform_1, window_bounds = array<i64: 1, 128, 128>}, {transform_indices = @transform_2, window_bounds = array<i64: 1, 1, 128>}, {transform_indices = @transform_3, window_bounds = array<i64: 1, 8, 128>}]} {
    %c0_i32 = arith.constant 0 : i32
    %0 = arith.cmpi eq, %arg1, %c0_i32 : i32
    %1 = arith.extui %0 : i1 to i32
    %c0_i32_0 = arith.constant 0 : i32
    %2 = arith.cmpi ne, %1, %c0_i32_0 : i32
    scf.if %2 {
      %c0_12 = arith.constant 0 : index
      %c0_13 = arith.constant 0 : index
      %18 = vector.load %arg2[%c0_12, %c0_13] : memref<8x128xf32, #tpu.memory_space<vmem>>, vector<8x128xf32>
      %c0_14 = arith.constant 0 : index
      %c0_15 = arith.constant 0 : index
      %19 = vector.load %arg6[%c0_14, %c0_15] : memref<8x128xf32, #tpu.memory_space<vmem>>, vector<8x128xf32>
      tpu.vector_store %arg6[%c0_14, %c0_15], %18 {strides = array<i32>} : memref<8x128xf32, #tpu.memory_space<vmem>>, vector<8x128xf32>,
    } else {
    }
    %c0 = arith.constant 0 : index
    %c0_1 = arith.constant 0 : index
    %3 = vector.load %arg6[%c0, %c0_1] : memref<8x128xf32, #tpu.memory_space<vmem>>, vector<8x128xf32>
    %c0_2 = arith.constant 0 : index
    %c0_3 = arith.constant 0 : index
    %c0_4 = arith.constant 0 : index
    %4 = vector.load %arg3[%c0_2, %c0_3, %c0_4] : memref<1x128x128xf32, #tpu.memory_space<vmem>>, vector<1x128x128xf32>
    %5 = vector.shape_cast %4 : vector<1x128x128xf32> to vector<128x128xf32>
    %cst = arith.constant dense<0.000000e+00> : vector<8x128xf32>
    %6 = tpu.matmul %3, %5, %cst {dimension_numbers = #tpu.dot_dimension_numbers<[1], [0], [0], [1], [0, 0, 1, 1], [], []>} : vector<8x128xf32>, vector<128x128xf32>, vector<8x128xf32> -> vector<8x128xf32>
    %c0_5 = arith.constant 0 : index
    %c0_6 = arith.constant 0 : index
    %c0_7 = arith.constant 0 : index
    %7 = vector.load %arg4[%c0_5, %c0_6, %c0_7] : memref<1x1x128xf32, #tpu.memory_space<vmem>>, vector<1x1x128xf32>
    %8 = vector.shape_cast %7 : vector<1x1x128xf32> to vector<1x128xf32>
    %9 = vector.broadcast %8 : vector<1x128xf32> to vector<8x128xf32>
    %10 = arith.addf %6, %9 : vector<8x128xf32>
    %c0_8 = arith.constant 0 : index
    %c0_9 = arith.constant 0 : index
    %c0_10 = arith.constant 0 : index
    %11 = vector.load %arg5[%c0_8, %c0_9, %c0_10] : memref<1x8x128xf32, #tpu.memory_space<vmem>>, vector<1x8x128xf32>
    %12 = vector.shape_cast %11 : vector<1x8x128xf32> to vector<8x128xf32>
    %13 = vector.shape_cast %10 : vector<8x128xf32> to vector<1x8x128xf32>
    tpu.vector_store %arg5[%c0_8, %c0_9, %c0_10], %13 {strides = array<i32>} : memref<1x8x128xf32, #tpu.memory_space<vmem>>, vector<1x8x128xf32>,
    %c1_i32 = arith.constant 1 : i32
    %14 = arith.addi %arg1, %c1_i32 : i32
    %c4_i32 = arith.constant 4 : i32
    %15 = arith.cmpi slt, %14, %c4_i32 : i32
    %16 = arith.extui %15 : i1 to i32
    %c0_i32_11 = arith.constant 0 : i32
    %17 = arith.cmpi ne, %16, %c0_i32_11 : i32
    scf.if %17 {
      %cst_12 = arith.constant 0.000000e+00 : f32
      %18 = vector.broadcast %cst_12 : f32 to vector<8x128xf32>
      %19 = arith.maximumf %10, %18 : vector<8x128xf32>
      %c0_13 = arith.constant 0 : index
      %c0_14 = arith.constant 0 : index
      %20 = vector.load %arg6[%c0_13, %c0_14] : memref<8x128xf32, #tpu.memory_space<vmem>>, vector<8x128xf32>
      tpu.vector_store %arg6[%c0_13, %c0_14], %19 {strides = array<i32>} : memref<8x128xf32, #tpu.memory_space<vmem>>, vector<8x128xf32>,
    } else {
    }
    return
  }
  func.func @transform_0(%arg0: i32, %arg1: i32) -> (i32, i32) {
    %c0_i32 = arith.constant 0 : i32
    %c0_i32_0 = arith.constant 0 : i32
    return %arg0, %c0_i32 : i32, i32
  }
  func.func @transform_1(%arg0: i32, %arg1: i32) -> (i32, i32, i32) {
    %c0_i32 = arith.constant 0 : i32
    %c0_i32_0 = arith.constant 0 : i32
    %c0_i32_1 = arith.constant 0 : i32
    return %arg1, %c0_i32, %c0_i32_0 : i32, i32, i32
  }
  func.func @transform_2(%arg0: i32, %arg1: i32) -> (i32, i32, i32) {
    %c0_i32 = arith.constant 0 : i32
    %c0_i32_0 = arith.constant 0 : i32
    %c0_i32_1 = arith.constant 0 : i32
    return %arg1, %c0_i32, %c0_i32_0 : i32, i32, i32
  }
  func.func @transform_3(%arg0: i32, %arg1: i32) -> (i32, i32, i32) {
    %c0_i32 = arith.constant 0 : i32
    %c0_i32_0 = arith.constant 0 : i32
    return %arg1, %arg0, %c0_i32 : i32, i32, i32
  }
}

</mosaic_0001>

<llo_original>
// kernel: forward.1
$region0: #{forward.1}
  #allocation0 [shape = 'u32[]', space=smem, size = 0x4, offset = 0x4, fixed_abs, tag = 'smem constant byte address 0x4 - core index']
  #allocation1 [shape = 'u32[144,128]{1,0:T(1,128)}', space=vmem, size = 0x12000, scoped, tag = 'internal scratch']
  #allocation2 [shape = 'f32[8,128]{1,0:T(8,128)}', space=vmem, size = 0x1000, scoped, tag = 'scratch operand']
  %s0 = inlined_call_operand.vmem [shape: f32[8,128], index: 0, kind: input, shape index: {}]
  %s1 = inlined_call_operand.hbm [shape: f32[4,128,128], index: 1, kind: input, shape index: {}]
  %s2 = inlined_call_operand.vmem [shape: f32[4,1,128], index: 2, kind: input, shape index: {}]
  %s3 = inlined_call_operand.vmem [shape: f32[4,8,128], index: 3, kind: output, shape index: {}]
  %s4 = sld [smem:[#allocation0]]
  $region57: #{forward.1} parent=0
    _
  %s6 = ssub.s32 1, %s4
  %s7 = scalar_select 0, %s6, %s4
  $region1: #{forward.1} parent=0
    #allocation3 [shape = 'u8[131072]{0}', space=vmem, size = 0x20000, scoped, tag = 'input window, operand 1']
    #allocation4 [shape = 's32[2]{0}', space=sflag, size = 0x8, scoped, tag = 'scoped memory for forward.1']
    %8 = vsyncpa [#allocation4], 0
    %s9 = scalar_lea.sflag [#allocation4], 1
    %10 = vsyncpa %s9, 0
    loop: start=0, step=1, limit=6
    $region2: #{forward.1} parent=1 // loop_pre_header
      _
    $region3: #{forward.1} parent=1 // loop_header
      %s12 = sphi 0, %s16
      %p13 = scmp.ge.s32.totalorder %s12, 6
      %s19 = sphi 0, %s31
      %s20 = sphi 0, %s27
      %s21 = sphi 0, %s19
      %s22 = sphi 0, %s20
      %s23 = sphi 0, %s21
      %s24 = sphi 0, %s22
      %s34 = sphi 0, %s36
      %s37 = sphi 0, %s34
      %s38 = sphi 0, %s37
      %s54 = sphi 0, %s38
      %s60 = sphi 0, %s62
      %s63 = sphi 0, %s60
      %s64 = sphi 0, %s63
      %s80 = sphi 0, %s64
      %s86 = sphi 0, %s88
      %s89 = sphi 0, %s86
      %s90 = sphi 0, %s89
      %s106 = sphi 0, %s90
      %s114 = sphi 0, %s116
      %s117 = sphi 0, %s114
      %s118 = sphi 0, %s117
      %s134 = sphi 0, %s118
    $region4: #{forward.1} parent=1 // loop_header_branch
      %15 = sbr.rel (%p13) target = $region8
    $region5: #{forward.1} parent=1 // loop_body
      %s17 = ssub.s32 %s12, 1
      %s18 = ssub.s32 %s12, 2
      %s25 = sadd.s32 1, %s20
      %p26 = scmp.ge.s32.totalorder %s25, 4
      %s27 = scalar_select %p26, 0, %s25
      %s28 = sadd.s32 1, %s19
      %s29 = scalar_select %p26, %s28, %s19
      %p30 = scmp.ge.s32.totalorder %s29, 1
      %s31 = scalar_select %p30, 0, %s29
      %s32 = ssub.s32 %s19, %s31
      %p33 = scmp.eq.s32.totalorder %s32, 0
      %s35 = sadd.s32 %s34, 1
      %s36 = scalar_select %p33, %s34, %s35
      %p39 = pneg %p33
      %p40 = scmp.eq.s32.totalorder %s12, 3
      %p41 = por %p39, %p40
      %p42 = scmp.ne.s32.totalorder %s34, %s37
      %p43 = scmp.eq.s32.totalorder %s12, 0
      %p44 = por %p42, %p43
      %p45 = scmp.ne.s32.totalorder %s34, %s37
      %p46 = scmp.eq.s32.totalorder %s17, 3
      %p47 = por %p45, %p46
      %p48 = scmp.ne.s32.totalorder %s37, %s38
      %p49 = scmp.eq.s32.totalorder %s17, 0
      %p50 = por %p48, %p49
      %p51 = scmp.ne.s32.totalorder %s37, %s38
      %p52 = scmp.eq.s32.totalorder %s18, 3
      %p53 = por %p51, %p52
      %p55 = scmp.ne.s32.totalorder %s38, %s54
      %p56 = scmp.eq.s32.totalorder %s18, 0
      %p57 = por %p55, %p56
      %s58 = ssub.s32 %s20, %s27
      %p59 = scmp.eq.s32.totalorder %s58, 0
      %s61 = sadd.s32 %s60, 1
      %s62 = scalar_select %p59, %s60, %s61
      %p65 = pneg %p59
      %p66 = scmp.eq.s32.totalorder %s12, 3
      %p67 = por %p65, %p66
      %p68 = scmp.ne.s32.totalorder %s60, %s63
      %p69 = scmp.eq.s32.totalorder %s12, 0
      %p70 = por %p68, %p69
      %p71 = scmp.ne.s32.totalorder %s60, %s63
      %p72 = scmp.eq.s32.totalorder %s17, 3
      %p73 = por %p71, %p72
      %p74 = scmp.ne.s32.totalorder %s63, %s64
      %p75 = scmp.eq.s32.totalorder %s17, 0
      %p76 = por %p74, %p75
      %p77 = scmp.ne.s32.totalorder %s63, %s64
      %p78 = scmp.eq.s32.totalorder %s18, 3
      %p79 = por %p77, %p78
      %p81 = scmp.ne.s32.totalorder %s64, %s80
      %p82 = scmp.eq.s32.totalorder %s18, 0
      %p83 = por %p81, %p82
      %s84 = ssub.s32 %s20, %s27
      %p85 = scmp.eq.s32.totalorder %s84, 0
      %s87 = sadd.s32 %s86, 1
      %s88 = scalar_select %p85, %s86, %s87
      %p91 = pneg %p85
      %p92 = scmp.eq.s32.totalorder %s12, 3
      %p93 = por %p91, %p92
      %p94 = scmp.ne.s32.totalorder %s86, %s89
      %p95 = scmp.eq.s32.totalorder %s12, 0
      %p96 = por %p94, %p95
      %p97 = scmp.ne.s32.totalorder %s86, %s89
      %p98 = scmp.eq.s32.totalorder %s17, 3
      %p99 = por %p97, %p98
      %p100 = scmp.ne.s32.totalorder %s89, %s90
      %p101 = scmp.eq.s32.totalorder %s17, 0
      %p102 = por %p100, %p101
      %p103 = scmp.ne.s32.totalorder %s89, %s90
      %p104 = scmp.eq.s32.totalorder %s18, 3
      %p105 = por %p103, %p104
      %p107 = scmp.ne.s32.totalorder %s90, %s106
      %p108 = scmp.eq.s32.totalorder %s18, 0
      %p109 = por %p107, %p108
      %s110 = ssub.s32 %s20, %s27
      %s111 = ssub.s32 %s19, %s31
      %s112 = sor.u32 %s110, %s111
      %p113 = scmp.eq.s32.totalorder %s112, 0
      %s115 = sadd.s32 %s114, 1
      %s116 = scalar_select %p113, %s114, %s115
      %p119 = pneg %p113
      %p120 = scmp.eq.s32.totalorder %s12, 3
      %p121 = por %p119, %p120
      %p122 = scmp.ne.s32.totalorder %s114, %s117
      %p123 = scmp.eq.s32.totalorder %s12, 0
      %p124 = por %p122, %p123
      %p125 = scmp.ne.s32.totalorder %s114, %s117
      %p126 = scmp.eq.s32.totalorder %s17, 3
      %p127 = por %p125, %p126
      %p128 = scmp.ne.s32.totalorder %s117, %s118
      %p129 = scmp.eq.s32.totalorder %s17, 0
      %p130 = por %p128, %p129
      %p131 = scmp.ne.s32.totalorder %s117, %s118
      %p132 = scmp.eq.s32.totalorder %s18, 3
      %p133 = por %p131, %p132
      %p135 = scmp.ne.s32.totalorder %s118, %s134
      %p136 = scmp.eq.s32.totalorder %s18, 0
      %p137 = por %p135, %p136
      %p138 = scmp.le.s32.totalorder 1, %s12
      %p139 = scmp.lt.s32.totalorder %s12, 5
      %p140 = pnand %p138, %p139
      %p141 = pneg %p140
      // Predicated region
      $region9: #{forward.1} parent=5 // pred_check
        _
      $region10: #{forward.1} parent=5 // pred_check_branch
        %143 = sbr.rel (%p140) target = $region12
      $region11: #{forward.1} parent=5 // pred_region
        %s144 = ssub.s32 %s12, 1
        // Predicated region
        $region13: #{forward.1} parent=11 // pred_check
          %p145 = pneg %p50
        $region14: #{forward.1} parent=11 // pred_check_branch
          %147 = sbr.rel (%p145) target = $region16
        $region15: #{forward.1} parent=11 // pred_region
          %p148 = scmp.lt.s32.totalorder %s21, 0
          %s149 = scalar_select %p148, %s21, 0
          %s150 = smul.addr %s149, 8
          %s151 = scalar_lea.vmem %s0, %s150
        $region16: #{forward.1} parent=11 // pred_fallthru
          _
      $region12: #{forward.1} parent=5 // pred_fallthru
        _
      %p152 = scmp.lt.s32.totalorder %s12, 4
      // Predicated region
      $region17: #{forward.1} parent=5 // pred_check
        %p153 = pneg %p152
      $region18: #{forward.1} parent=5 // pred_check_branch
        %155 = sbr.rel (%p153) target = $region20
      $region19: #{forward.1} parent=5 // pred_region
        // Predicated region
        $region21: #{forward.1} parent=19 // pred_check
          %p156 = pneg %p70
        $region22: #{forward.1} parent=19 // pred_check_branch
          %158 = sbr.rel (%p156) target = $region24
        $region23: #{forward.1} parent=19 // pred_region
          %s159 = sand.u32 %s60, 1
          %s160 = scalar_lea.sflag [#allocation4], %s159
          %s161 = sand.u32 %s60, 1
          %s162 = smul.addr %s161, 128
          %s163 = scalar_lea.vmem [#allocation3], %s162
          %s165 = ssub.s32 2048, 2048
          %166 = vsyncadd %s160, %s165
          %s167 = smul.addr %s20, 16
          %s168 = smul.addr %s167, 128
          %s169 = scalar_lea.hbm %s1, %s168
          %s170 = sshll.u32 %s163, 4
          %s171 = int_to_ptr.vmem [resolvable:$true] %s170
          %176 = dma.hbm_to_vmem [thread:$0]  %s169, 2048, %s171, %s160, 128, 128, 8
        $region24: #{forward.1} parent=19 // pred_fallthru
          _
        // Predicated region
        $region25: #{forward.1} parent=19 // pred_check
          %p177 = pneg %p96
        $region26: #{forward.1} parent=19 // pred_check_branch
          %179 = sbr.rel (%p177) target = $region28
        $region27: #{forward.1} parent=19 // pred_region
          %p180 = scmp.lt.s32.totalorder %s20, 3
          %s181 = scalar_select %p180, %s20, 3
          %s182 = scalar_lea.vmem %s2, %s181
        $region28: #{forward.1} parent=19 // pred_fallthru
          _
      $region20: #{forward.1} parent=5 // pred_fallthru
        _
      %p183 = scmp.le.s32.totalorder 1, %s12
      %p184 = scmp.lt.s32.totalorder %s12, 5
      %p185 = pnand %p183, %p184
      %p186 = pneg %p185
      // Predicated region
      $region29: #{forward.1} parent=5 // pred_check
        _
      $region30: #{forward.1} parent=5 // pred_check_branch
        %188 = sbr.rel (%p185) target = $region32
      $region31: #{forward.1} parent=5 // pred_region
        %s189 = ssub.s32 %s12, 1
        %s190 = sand.u32 %s63, 1
        %s191 = scalar_lea.sflag [#allocation4], %s190
        %s192 = sand.u32 %s63, 1
        %s193 = smul.addr %s192, 128
        %s194 = scalar_lea.vmem [#allocation3], %s193
        // Predicated region
        $region33: #{forward.1} parent=31 // pred_check
          %p195 = pneg %p76
        $region34: #{forward.1} parent=31 // pred_check_branch
          %197 = sbr.rel (%p195) target = $region36
        $region35: #{forward.1} parent=31 // pred_region
          %198 = dma.done %s191, 2048
        $region36: #{forward.1} parent=31 // pred_fallthru
          _
        %p199 = scmp.lt.s32.totalorder %s21, 0
        %s200 = scalar_select %p199, %s21, 0
        %s201 = smul.addr %s200, 8
        %s202 = scalar_lea.vmem %s0, %s201
        %p203 = pneg %p50
        %p204 = pneg %p47
        %s205 = sand.u32 %s63, 1
        %s206 = scalar_lea.sflag [#allocation4], %s205
        %s207 = sand.u32 %s63, 1
        %s208 = smul.addr %s207, 128
        %s209 = scalar_lea.vmem [#allocation3], %s208
        %p210 = pneg %p76
        %p211 = pneg %p73
        %p212 = scmp.lt.s32.totalorder %s22, 3
        %s213 = scalar_select %p212, %s22, 3
        %s214 = scalar_lea.vmem %s2, %s213
        %p215 = pneg %p102
        %p216 = pneg %p99
        %p217 = pneg %p130
        %p218 = pneg %p127
        %p219 = scmp.lt.s32.totalorder %s22, 3
        %s220 = scalar_select %p219, %s22, 3
        %p221 = scmp.lt.s32.totalorder %s21, 0
        %s222 = scalar_select %p221, %s21, 0
        %s223 = sadd.s32 %s222, %s220
        %s224 = smul.addr %s223, 8
        %s225 = scalar_lea.vmem %s3, %s224
        %p226 = scmp.lt.s32.totalorder %s21, 0
        %s227 = scalar_select %p226, %s21, 0
        %s228 = smul.addr %s227, 8
        %s229 = scalar_lea.vmem %s0, %s228
        %p230 = scmp.lt.s32.totalorder %s22, 3
        %s231 = scalar_select %p230, %s22, 3
        %s232 = scalar_lea.vmem %s2, %s231
        %p233 = scmp.lt.s32.totalorder %s22, 3
        %s234 = scalar_select %p233, %s22, 3
        %p235 = scmp.lt.s32.totalorder %s21, 0
        %s236 = scalar_select %p235, %s21, 0
        %s237 = sadd.s32 %s236, %s234
        %s238 = smul.addr %s237, 8
        %s239 = scalar_lea.vmem %s3, %s238
        %p240 = scmp.eq.s32.totalorder %s22, 0
        // Predicated region
        $region37: #{forward.1} parent=31 // pred_check
          %p241 = pneg %p240
        $region38: #{forward.1} parent=31 // pred_check_branch
          %243 = sbr.rel (%p241) target = $region40
        $region39: #{forward.1} parent=31 // pred_region
          %v244 = vld [vmem:[%s229] sm:$0xff]
          %245 = vst [vmem:[#allocation2] sm:$0xff] %v244
        $region40: #{forward.1} parent=31 // pred_fallthru
          _
        %v246 = vld [vmem:[#allocation2] sm:$0xff]
        %v247 = vld [vmem:[%s194] sm:$0xff]
        %v248 = vld [vmem:[%s194 + $0x8] sm:$0xff]
        %v249 = vld [vmem:[%s194 + $0x10] sm:$0xff]
        %v250 = vld [vmem:[%s194 + $0x18] sm:$0xff]
        %v251 = vld [vmem:[%s194 + $0x20] sm:$0xff]
        %v252 = vld [vmem:[%s194 + $0x28] sm:$0xff]
        %v253 = vld [vmem:[%s194 + $0x30] sm:$0xff]
        %v254 = vld [vmem:[%s194 + $0x38] sm:$0xff]
        %v255 = vld [vmem:[%s194 + $0x40] sm:$0xff]
        %v256 = vld [vmem:[%s194 + $0x48] sm:$0xff]
        %v257 = vld [vmem:[%s194 + $0x50] sm:$0xff]
        %v258 = vld [vmem:[%s194 + $0x58] sm:$0xff]
        %v259 = vld [vmem:[%s194 + $0x60] sm:$0xff]
        %v260 = vld [vmem:[%s194 + $0x68] sm:$0xff]
        %v261 = vld [vmem:[%s194 + $0x70] sm:$0xff]
        %v262 = vld [vmem:[%s194 + $0x78] sm:$0xff]
        %v263 = vld [vmem:[%s232] sm:$0x1]
        %v265 = vlaneseq
        %v266 = vshrl.u32 %v265, 7
        %v267 = vsub.s32 0, %v266
        %v268 = vrot.slane %v263, %v267
        %270 = vmatprep.subr.mxu0 0.0
        %271 = vmatpush1.msra.mxu0 %v262
        %272 = vmatprep.subr.mxu0 0.0
        %273 = vmatpush1.msra.mxu0 %v261
        %274 = vmatprep.subr.mxu0 0.0
        %275 = vmatpush1.msra.mxu0 %v260
        %276 = vmatprep.subr.mxu0 0.0
        %277 = vmatpush1.msra.mxu0 %v259
        %278 = vmatprep.subr.mxu0 0.0
        %279 = vmatpush1.msra.mxu0 %v258
        %280 = vmatprep.subr.mxu0 0.0
        %281 = vmatpush1.msra.mxu0 %v257
        %282 = vmatprep.subr.mxu0 0.0
        %283 = vmatpush1.msra.mxu0 %v256
        %284 = vmatprep.subr.mxu0 0.0
        %285 = vmatpush1.msra.mxu0 %v255
        %286 = vmatprep.subr.mxu0 0.0
        %287 = vmatpush1.msra.mxu0 %v254
        %288 = vmatprep.subr.mxu0 0.0
        %289 = vmatpush1.msra.mxu0 %v253
        %290 = vmatprep.subr.mxu0 0.0
        %291 = vmatpush1.msra.mxu0 %v252
        %292 = vmatprep.subr.mxu0 0.0
        %293 = vmatpush1.msra.mxu0 %v251
        %294 = vmatprep.subr.mxu0 0.0
        %295 = vmatpush1.msra.mxu0 %v250
        %296 = vmatprep.subr.mxu0 0.0
        %297 = vmatpush1.msra.mxu0 %v249
        %298 = vmatprep.subr.mxu0 0.0
        %299 = vmatpush1.msra.mxu0 %v248
        %300 = vmatprep.subr.mxu0 0.0
        %301 = vmatpush1.msra.mxu0 %v247
        %302 = vmatprep.subr.mxu0 0.0
        %303 = vmatpush2.msra.mxu0 0.0
        %304 = vmatprep.subr.mxu0 0.0
        %305 = vmatpush2.msra.mxu0 0.0
        %306 = vmatprep.subr.mxu0 0.0
        %307 = vmatpush2.msra.mxu0 0.0
        %308 = vmatprep.subr.mxu0 0.0
        %309 = vmatpush2.msra.mxu0 0.0
        %310 = vmatprep.subr.mxu0 0.0
        %311 = vmatpush2.msra.mxu0 0.0
        %312 = vmatprep.subr.mxu0 0.0
        %313 = vmatpush2.msra.mxu0 0.0
        %314 = vmatprep.subr.mxu0 0.0
        %315 = vmatpush2.msra.mxu0 0.0
        %316 = vmatprep.subr.mxu0 0.0
        %317 = vmatpush2.msra.mxu0 0.0
        %318 = vmatprep.subr.mxu0 0.0
        %319 = vmatpush2.msra.mxu0 0.0
        %320 = vmatprep.subr.mxu0 0.0
        %321 = vmatpush2.msra.mxu0 0.0
        %322 = vmatprep.subr.mxu0 0.0
        %323 = vmatpush2.msra.mxu0 0.0
        %324 = vmatprep.subr.mxu0 0.0
        %325 = vmatpush2.msra.mxu0 0.0
        %326 = vmatprep.subr.mxu0 0.0
        %327 = vmatpush2.msra.mxu0 0.0
        %328 = vmatprep.subr.mxu0 0.0
        %329 = vmatpush2.msra.mxu0 0.0
        %330 = vmatprep.subr.mxu0 0.0
        %331 = vmatpush2.msra.mxu0 0.0
        %332 = vmatprep.subr.mxu0 0.0
        %333 = vmatpush2.msra.mxu0 0.0
        %334 = vmatprep.mubr.f32.mxu0 0.0
        %335 = vmatmul.mubr.f32.gmra.mxu0 %v246
        %v336 = vpop.f32.mrf.mxu0
        %v337 = vadd.f32 %v268, %v336
        %v338 = vpop.f32.mrf.mxu0
        %339 = vdwg.mxu0
        %340 = vst [vmem:[%s239] sm:$0xff] %v337
        %s341 = sadd.s32 %s22, 1
        %p342 = scmp.lt.s32.totalorder %s341, 4
        // Predicated region
        $region41: #{forward.1} parent=31 // pred_check
          %p343 = pneg %p342
        $region42: #{forward.1} parent=31 // pred_check_branch
          %345 = sbr.rel (%p343) target = $region44
        $region43: #{forward.1} parent=31 // pred_region
          %v346 = vmax.f32 %v337, 0.0
          %347 = vst [vmem:[#allocation2] sm:$0xff] %v346
        $region44: #{forward.1} parent=31 // pred_fallthru
          _
        %p348 = scmp.lt.s32.totalorder %s22, 3
        %s349 = scalar_select %p348, %s22, 3
        %p350 = scmp.lt.s32.totalorder %s21, 0
        %s351 = scalar_select %p350, %s21, 0
        %s352 = sadd.s32 %s351, %s349
        %s353 = smul.addr %s352, 8
        %s354 = scalar_lea.vmem %s3, %s353
        // Predicated region
        $region45: #{forward.1} parent=31 // pred_check
          %p355 = pneg %p127
        $region46: #{forward.1} parent=31 // pred_check_branch
          %357 = sbr.rel (%p355) target = $region48
        $region47: #{forward.1} parent=31 // pred_region
          _
        $region48: #{forward.1} parent=31 // pred_fallthru
          _
      $region32: #{forward.1} parent=5 // pred_fallthru
        _
      %p358 = scmp.le.s32.totalorder 2, %s12
      // Predicated region
      $region49: #{forward.1} parent=5 // pred_check
        %p359 = pneg %p358
      $region50: #{forward.1} parent=5 // pred_check_branch
        %361 = sbr.rel (%p359) target = $region52
      $region51: #{forward.1} parent=5 // pred_region
        %s362 = ssub.s32 %s12, 2
        // Predicated region
        $region53: #{forward.1} parent=51 // pred_check
          %p363 = pneg %p133
        $region54: #{forward.1} parent=51 // pred_check_branch
          %365 = sbr.rel (%p363) target = $region56
        $region55: #{forward.1} parent=51 // pred_region
          %p366 = scmp.lt.s32.totalorder %s24, 3
          %s367 = scalar_select %p366, %s24, 3
          %p368 = scmp.lt.s32.totalorder %s23, 0
          %s369 = scalar_select %p368, %s23, 0
          %s370 = sadd.s32 %s369, %s367
          %s371 = smul.addr %s370, 8
          %s372 = scalar_lea.vmem %s3, %s371
        $region56: #{forward.1} parent=51 // pred_fallthru
          _
      $region52: #{forward.1} parent=5 // pred_fallthru
        _
    $region6: #{forward.1} parent=1 // loop_footer
      %s16 = sadd.s32 1, %s12
    $region7: #{forward.1} parent=1 // loop_footer_branch
      %11 = sbr.rel target = $region3
    $region8: #{forward.1} parent=1 // loop_exit
      _
    %373 = vsyncpa [#allocation4], 1
    %s374 = scalar_lea.sflag [#allocation4], 1
    %375 = vsyncpa %s374, 1

</llo_original>
